<compile_context>
chip_gen: v5e
topology: v5e:2x2
jax: 0.10.0
libtpu: 0.0.40
codegen_flags: <defaults>
</compile_context>

<pallas_src>
import jax
import jax.numpy as jnp
from jax.experimental import pallas as pl
from jax.experimental.pallas import tpu as pltpu


def _round_up(x, m):
    return ((x + m - 1) // m) * m


def _vmem_capacity_bytes():
    try:
        return int(pltpu.get_tpu_info().vmem_capacity_bytes)
    except Exception:
        return 64 * 1024 * 1024  # conservative (v7x per-TC)


def _pick_f_tile(f, target, multiple=128):
    """Return (tf, f_pad): tf is the largest multiple-of-128 divisor of
    f_pad that is <= target, where f_pad = f rounded up to a multiple of 128.
    Always terminates with tf >= 128 dividing f_pad (no silent full-F blowup)."""
    f_pad = _round_up(f, multiple)
    t = min(max(target, multiple), f_pad)
    t = (t // multiple) * multiple
    while t > multiple and f_pad % t != 0:
        t -= multiple
    return max(t, multiple), f_pad


# ----------------------------------------------------------------------------
# Kernels
# ----------------------------------------------------------------------------
def ffn_resident_kernel(x_ref, w1_ref, b1_ref, w2_ref, b2_ref, o_ref):
    # x_ref: (tm, D) native dtype; w1_ref: (D, F); b1_ref: (1, F) f32
    # w2_ref: (F, D); b2_ref: (1, D) f32; o_ref: (tm, D)
    x = x_ref[...].astype(w1_ref.dtype)              # per-tile cast, no HBM pass
    h = jnp.dot(x, w1_ref[...], preferred_element_type=jnp.float32)
    h = jnp.maximum(h + b1_ref[...], 0.0)
    # TODO(synk): dropout is identity here (eval mode); training-mode dropout
    # would use pltpu.prng_seed + pltpu.stateful_bernoulli on h.
    y = jnp.dot(h.astype(w2_ref.dtype), w2_ref[...],
                preferred_element_type=jnp.float32)
    o_ref[...] = (y + b2_ref[...]).astype(o_ref.dtype)


def ffn_tiled_kernel(x_ref, w1_ref, b1_ref, w2_ref, b2_ref, o_ref, acc_ref):
    # Fallback when W1/W2 do not fit VMEM: hidden dim reduced on grid axis 1.
    j = pl.program_id(1)

    @pl.when(j == 0)
    def _():
        # Start the accumulator at b2: saves the (tm, D) add at finalize.
        acc_ref[...] = jnp.broadcast_to(b2_ref[...], acc_ref.shape)

    x = x_ref[...].astype(w1_ref.dtype)
    h = jnp.dot(x, w1_ref[...], preferred_element_type=jnp.float32)
    h = jnp.maximum(h + b1_ref[...], 0.0)
    # TODO(synk): dropout is identity here (eval mode).
    acc_ref[...] += jnp.dot(h.astype(w2_ref.dtype), w2_ref[...],
                            preferred_element_type=jnp.float32)

    @pl.when(j == pl.num_programs(1) - 1)
    def _():
        o_ref[...] = acc_ref[...].astype(o_ref.dtype)


# ----------------------------------------------------------------------------
# Wrapper
# ----------------------------------------------------------------------------
def position_wise_feed_forward(x, w1, b1, w2, b2, *, tm=512, tf_target=1024,
                               compute_dtype=jnp.bfloat16, force_path=None):
    """y = relu(x @ w1 + b1) @ w2 + b2,  x: [B, S, D] -> [B, S, D].

    w1: [D, F] (fc1.weight^T), b1: [F], w2: [F, D] (fc2.weight^T), b2: [D].
    Matmuls run in `compute_dtype` with f32 accumulation; bias adds and ReLU
    are done in f32; the output is cast back to x.dtype.
    `force_path` in {None, "resident", "tiled"} (testing/override only).
    """
    B, S, D = x.shape
    F = w1.shape[1]
    M = B * S
    out_dtype = x.dtype

    comp_bytes = jnp.dtype(compute_dtype).itemsize
    x_bytes = jnp.dtype(x.dtype).itemsize
    out_bytes = jnp.dtype(out_dtype).itemsize

    # Generation-aware VMEM budget (v7x: 64 MiB/TC, v5e/v6e: 128 MiB).
    vmem_cap = _vmem_capacity_bytes()
    vmem_limit = min(int(vmem_cap * 0.75), 96 * 1024 * 1024)
    budget = int(vmem_limit * 0.9)

    # Row tile: multiple of the sublane-pack factor (16 for bf16, 8 for f32).
    row_mult = 16 if comp_bytes < 4 else 8
    tm = max(row_mult, min(tm, _round_up(M, row_mult)))
    tm = _round_up(tm, row_mult)
    # v7x megacore: prefer >= 2 row tiles (both TensorCores busy) when rows allow.
    half = _round_up(pl.cdiv(M, 2), row_mult)
    if M > row_mult and half < tm:
        tm = half

    # --- resident-weights feasibility (weights + biases double-buffer-counted,
    #     double-buffered x/out tiles, f32 h + compute-dtype copy of h) ---
    def resident_vmem(tm_):
        wt = 2 * (2 * D * F * comp_bytes + (F + D) * 4)
        io = 2 * tm_ * D * (x_bytes + out_bytes)
        hid = tm_ * F * (4 + comp_bytes)
        return wt + io + hid

    tm_floor = max(row_mult, min(tm, 128))
    tm_res = tm
    while tm_res > tm_floor and resident_vmem(tm_res) > budget:
        tm_res = max(tm_floor, _round_up(tm_res // 2, row_mult))
    fits_resident = resident_vmem(tm_res) <= budget

    if force_path == "resident":
        use_resident = True
    elif force_path == "tiled":
        use_resident = False
    else:
        use_resident = fits_resident

    # x stays in native dtype (cast per tile in-kernel); no pad pass over x.
    x2 = x.reshape(M, D)
    # NOTE: in a real model, pre-cast/cache the compute-dtype weights outside
    # the per-call hot path; the cast below is a no-op when dtypes match.
    w1c = w1.astype(compute_dtype)
    w2c = w2.astype(compute_dtype)
    b1_2 = b1.reshape(1, F).astype(jnp.float32)
    b2_2 = b2.reshape(1, D).astype(jnp.float32)

    # NOTE: for small D (< 128, like the demo) output stores are masked
    # (lane-sparse); real transformer D (multiple of 128) is lane-dense.

    if use_resident:
        tm = tm_res
        grid = (pl.cdiv(M, tm),)
        cost = pl.CostEstimate(
            flops=4 * M * D * F,
            transcendentals=0,
            bytes_accessed=(M * D * (x_bytes + out_bytes)       # x, out once
                            + 2 * D * F * comp_bytes            # W1, W2 once
                            + (F + D) * 4))                     # biases
        out = pl.pallas_call(
            ffn_resident_kernel,
            out_shape=jax.ShapeDtypeStruct((M, D), out_dtype),
            grid_spec=pltpu.PrefetchScalarGridSpec(
                num_scalar_prefetch=0,
                grid=grid,
                in_specs=[
                    pl.BlockSpec((tm, D), lambda i: (i, 0)),   # x rows (streamed)
                    pl.BlockSpec((D, F), lambda i: (0, 0)),    # W1 resident
                    pl.BlockSpec((1, F), lambda i: (0, 0)),    # b1 resident
                    pl.BlockSpec((F, D), lambda i: (0, 0)),    # W2 resident
                    pl.BlockSpec((1, D), lambda i: (0, 0)),    # b2 resident
                ],
                out_specs=pl.BlockSpec((tm, D), lambda i: (i, 0)),
            ),
            compiler_params=pltpu.CompilerParams(
                dimension_semantics=("parallel",),
                vmem_limit_bytes=vmem_limit,
            ),
            cost_estimate=cost,
        )(x2, w1c, b1_2, w2c, b2_2)
        return out.reshape(B, S, D)

    # ---------------- F-tiled fallback (weights too large for VMEM) ----------
    tf, F_pad = _pick_f_tile(F, target=tf_target)

    def tiled_vmem(tm_, tf_):
        return (2 * tm_ * D * x_bytes                 # x tile (double-buffered)
                + 2 * 2 * D * tf_ * comp_bytes        # W1/W2 chunks (db)
                + 2 * (tf_ + D) * 4                   # bias chunks (db)
                + 2 * tm_ * D * out_bytes             # out tile (db)
                + tm_ * D * 4                         # f32 accumulator
                + tm_ * tf_ * (4 + comp_bytes))       # h f32 + compute copy

    while tiled_vmem(tm, tf) > budget:
        if tf > 128:
            tf, F_pad = _pick_f_tile(F, target=max(128, tf // 2))
        elif tm > row_mult:
            tm = max(row_mult, _round_up(tm // 2, row_mult))
        else:
            break

    if F_pad != F:
        # Zero-pad the hidden dim once (mathematically neutral: relu(0)=0).
        w1c = jnp.pad(w1c, ((0, 0), (0, F_pad - F)))
        b1_2 = jnp.pad(b1_2, ((0, 0), (0, F_pad - F)))
        w2c = jnp.pad(w2c, ((0, F_pad - F), (0, 0)))

    grid = (pl.cdiv(M, tm), F_pad // tf)
    grid_rows = grid[0]
    cost = pl.CostEstimate(
        flops=4 * M * D * F_pad,
        transcendentals=0,
        bytes_accessed=(M * D * (x_bytes + out_bytes)
                        # weights are re-streamed once per row tile:
                        + grid_rows * (2 * D * F_pad * comp_bytes
                                       + (F_pad + D) * 4)))
    out = pl.pallas_call(
        ffn_tiled_kernel,
        out_shape=jax.ShapeDtypeStruct((M, D), out_dtype),
        grid_spec=pltpu.PrefetchScalarGridSpec(
            num_scalar_prefetch=0,
            grid=grid,
            in_specs=[
                pl.BlockSpec((tm, D), lambda i, j: (i, 0)),    # x rows
                pl.BlockSpec((D, tf), lambda i, j: (0, j)),    # W1 F-chunk
                pl.BlockSpec((1, tf), lambda i, j: (0, j)),    # b1 F-chunk
                pl.BlockSpec((tf, D), lambda i, j: (j, 0)),    # W2 F-chunk
                pl.BlockSpec((1, D), lambda i, j: (0, 0)),     # b2
            ],
            out_specs=pl.BlockSpec((tm, D), lambda i, j: (i, 0)),
            scratch_shapes=[pltpu.VMEM((tm, D), jnp.float32)],
        ),
        compiler_params=pltpu.CompilerParams(
            dimension_semantics=("parallel", "arbitrary"),
            vmem_limit_bytes=vmem_limit,
        ),
        cost_estimate=cost,
    )(x2, w1c, b1_2, w2c, b2_2)
    return out.reshape(B, S, D)


if __name__ == "__main__":
    # Small shapes consistent with the module: batch=2, seq=8, latent=32, pf=64
    B, S, D, F = 2, 8, 32, 64
    key = jax.random.PRNGKey(0)
    k_x, k_w1, k_b1, k_w2, k_b2 = jax.random.split(key, 5)

    x = jax.random.normal(k_x, (B, S, D), dtype=jnp.float32)

    # Deterministic PyTorch-style init: U(-1/sqrt(fan_in), 1/sqrt(fan_in))
    lim1 = 1.0 / (D ** 0.5)
    lim2 = 1.0 / (F ** 0.5)
    w1 = jax.random.uniform(k_w1, (D, F), jnp.float32, -lim1, lim1)  # fc1.weight^T
    b1 = jax.random.uniform(k_b1, (F,),   jnp.float32, -lim1, lim1)
    w2 = jax.random.uniform(k_w2, (F, D), jnp.float32, -lim2, lim2)  # fc2.weight^T
    b2 = jax.random.uniform(k_b2, (D,),   jnp.float32, -lim2, lim2)

    # Reference in plain JAX (eval-mode dropout == identity).
    ref = jnp.maximum(x @ w1 + b1, 0.0) @ w2 + b2

    # f32 compute, resident-weights path: tight tolerance vs reference.
    y32 = jax.block_until_ready(
        position_wise_feed_forward(x, w1, b1, w2, b2, compute_dtype=jnp.float32))
    assert y32.shape == (B, S, D)
    assert jnp.allclose(y32, ref, atol=1e-5, rtol=1e-5), "f32 resident mismatch"

    # bf16 compute path (default, MXU-native): f32 accumulation, looser tol.
    ybf = jax.block_until_ready(position_wise_feed_forward(x, w1, b1, w2, b2))
    assert ybf.shape == (B, S, D)
    assert jnp.allclose(ybf, ref, atol=2e-2, rtol=2e-2), "bf16 resident mismatch"

    # Exercise the F-tiled fallback (hidden dim padded to 128, reduced on the
    # second grid axis with the f32 accumulator) to keep that path correct.
    yt = jax.block_until_ready(
        position_wise_feed_forward(x, w1, b1, w2, b2, compute_dtype=jnp.float32,
                                   force_path="tiled", tf_target=128))
    assert yt.shape == (B, S, D)
    assert jnp.allclose(yt, ref, atol=1e-5, rtol=1e-5), "f32 tiled mismatch"

    print("KERNEL_OK")
</pallas_src>

<mosaic_0001>
module attributes {stable_mosaic.version = 11 : i64} {
  func.func @ffn_resident_kernel(%arg0: i32, %arg1: memref<8x32xf32, #tpu.memory_space<vmem>>, %arg2: memref<32x64xf32, #tpu.memory_space<vmem>>, %arg3: memref<1x64xf32, #tpu.memory_space<vmem>>, %arg4: memref<64x32xf32, #tpu.memory_space<vmem>>, %arg5: memref<1x32xf32, #tpu.memory_space<vmem>>, %arg6: memref<8x32xf32, #tpu.memory_space<vmem>>) attributes {dimension_semantics = [#tpu.dimension_semantics<parallel>], iteration_bounds = array<i64: 2>, scalar_prefetch = 0 : i64, scratch_operands = 0 : i64, tpu.core_type = #tpu.core_type<tc>, window_params = [{transform_indices = @transform_0, window_bounds = array<i64: 8, 32>}, {pipeline_mode = #tpu.pipeline_mode<synchronous>, transform_indices = @transform_1, window_bounds = array<i64: 32, 64>}, {pipeline_mode = #tpu.pipeline_mode<synchronous>, transform_indices = @transform_2, window_bounds = array<i64: 1, 64>}, {pipeline_mode = #tpu.pipeline_mode<synchronous>, transform_indices = @transform_3, window_bounds = array<i64: 64, 32>}, {pipeline_mode = #tpu.pipeline_mode<synchronous>, transform_indices = @transform_4, window_bounds = array<i64: 1, 32>}, {transform_indices = @transform_5, window_bounds = array<i64: 8, 32>}]} {
    %c0 = arith.constant 0 : index
    %c0_0 = arith.constant 0 : index
    %0 = vector.load %arg1[%c0, %c0_0] : memref<8x32xf32, #tpu.memory_space<vmem>>, vector<8x32xf32>
    %c0_1 = arith.constant 0 : index
    %c0_2 = arith.constant 0 : index
    %1 = vector.load %arg2[%c0_1, %c0_2] : memref<32x64xf32, #tpu.memory_space<vmem>>, vector<32x64xf32>
    %cst = arith.constant dense<0.000000e+00> : vector<8x64xf32>
    %2 = tpu.matmul %0, %1, %cst {dimension_numbers = #tpu.dot_dimension_numbers<[1], [0], [0], [1], [0, 0, 1, 1], [], []>} : vector<8x32xf32>, vector<32x64xf32>, vector<8x64xf32> -> vector<8x64xf32>
    %c0_3 = arith.constant 0 : index
    %c0_4 = arith.constant 0 : index
    %3 = vector.load %arg3[%c0_3, %c0_4] : memref<1x64xf32, #tpu.memory_space<vmem>>, vector<1x64xf32>
    %4 = vector.broadcast %3 : vector<1x64xf32> to vector<8x64xf32>
    %5 = arith.addf %2, %4 : vector<8x64xf32>
    %cst_5 = arith.constant 0.000000e+00 : f32
    %6 = vector.broadcast %cst_5 : f32 to vector<8x64xf32>
    %7 = arith.maximumf %5, %6 : vector<8x64xf32>
    %c0_6 = arith.constant 0 : index
    %c0_7 = arith.constant 0 : index
    %8 = vector.load %arg4[%c0_6, %c0_7] : memref<64x32xf32, #tpu.memory_space<vmem>>, vector<64x32xf32>
    %cst_8 = arith.constant dense<0.000000e+00> : vector<8x32xf32>
    %9 = tpu.matmul %7, %8, %cst_8 {dimension_numbers = #tpu.dot_dimension_numbers<[1], [0], [0], [1], [0, 0, 1, 1], [], []>} : vector<8x64xf32>, vector<64x32xf32>, vector<8x32xf32> -> vector<8x32xf32>
    %c0_9 = arith.constant 0 : index
    %c0_10 = arith.constant 0 : index
    %10 = vector.load %arg5[%c0_9, %c0_10] : memref<1x32xf32, #tpu.memory_space<vmem>>, vector<1x32xf32>
    %11 = vector.broadcast %10 : vector<1x32xf32> to vector<8x32xf32>
    %12 = arith.addf %9, %11 : vector<8x32xf32>
    %c0_11 = arith.constant 0 : index
    %c0_12 = arith.constant 0 : index
    %13 = vector.load %arg6[%c0_11, %c0_12] : memref<8x32xf32, #tpu.memory_space<vmem>>, vector<8x32xf32>
    tpu.vector_store %arg6[%c0_11, %c0_12], %12 {strides = array<i32>} : memref<8x32xf32, #tpu.memory_space<vmem>>, vector<8x32xf32>,
    return
  }
  func.func @transform_0(%arg0: i32) -> (i32, i32) {
    %c0_i32 = arith.constant 0 : i32
    %c0_i32_0 = arith.constant 0 : i32
    return %arg0, %c0_i32 : i32, i32
  }
  func.func @transform_1(%arg0: i32) -> (i32, i32) {
    %c0_i32 = arith.constant 0 : i32
    %c0_i32_0 = arith.constant 0 : i32
    %c0_i32_1 = arith.constant 0 : i32
    return %c0_i32, %c0_i32_0 : i32, i32
  }
  func.func @transform_2(%arg0: i32) -> (i32, i32) {
    %c0_i32 = arith.constant 0 : i32
    %c0_i32_0 = arith.constant 0 : i32
    %c0_i32_1 = arith.constant 0 : i32
    return %c0_i32, %c0_i32_0 : i32, i32
  }
  func.func @transform_3(%arg0: i32) -> (i32, i32) {
    %c0_i32 = arith.constant 0 : i32
    %c0_i32_0 = arith.constant 0 : i32
    %c0_i32_1 = arith.constant 0 : i32
    return %c0_i32, %c0_i32_0 : i32, i32
  }
  func.func @transform_4(%arg0: i32) -> (i32, i32) {
    %c0_i32 = arith.constant 0 : i32
    %c0_i32_0 = arith.constant 0 : i32
    %c0_i32_1 = arith.constant 0 : i32
    return %c0_i32, %c0_i32_0 : i32, i32
  }
  func.func @transform_5(%arg0: i32) -> (i32, i32) {
    %c0_i32 = arith.constant 0 : i32
    %c0_i32_0 = arith.constant 0 : i32
    return %arg0, %c0_i32 : i32, i32
  }
}

</mosaic_0001>

<llo_original>
// kernel: tpu_custom_call.1
$region0: #{tpu_custom_call.1}
  #allocation0 [shape = 'u32[]', space=smem, size = 0x4, offset = 0x4, fixed_abs, tag = 'smem constant byte address 0x4 - core index']
  #allocation1 [shape = 'u32[72,128]{1,0:T(1,128)}', space=vmem, size = 0x9000, scoped, tag = 'internal scratch']
  %s0 = inlined_call_operand.vmem [shape: f32[16,32], index: 0, kind: input, shape index: {}]
  %s1 = inlined_call_operand.vmem [shape: f32[32,64], index: 1, kind: input, shape index: {}]
  %s2 = inlined_call_operand.vmem [shape: f32[1,64], index: 2, kind: input, shape index: {}]
  %s3 = inlined_call_operand.vmem [shape: f32[64,32], index: 3, kind: input, shape index: {}]
  %s4 = inlined_call_operand.vmem [shape: f32[1,32], index: 4, kind: input, shape index: {}]
  %s5 = inlined_call_operand.hbm [shape: f32[16,32], index: 5, kind: output, shape index: {}]
  %s6 = sld [smem:[#allocation0]]
  $region53: #{tpu_custom_call.1} parent=0
    _
  %s8 = ssub.s32 1, %s6
  %s9 = scalar_select 0, %s8, %s6
  $region1: #{tpu_custom_call.1} parent=0
    #allocation2 [shape = 'u8[8192]{0}', space=vmem, size = 0x2000, scoped, tag = 'output window, operand 0']
    #allocation3 [shape = 's32[2]{0}', space=sflag, size = 0x8, scoped, tag = 'scoped memory for tpu_custom_call.1']
    %10 = vsyncpa [#allocation3], 0
    %s11 = scalar_lea.sflag [#allocation3], 1
    %12 = vsyncpa %s11, 0
    loop: start=0, step=1, limit=4
    $region2: #{tpu_custom_call.1} parent=1 // loop_pre_header
      _
    $region3: #{tpu_custom_call.1} parent=1 // loop_header
      %s14 = sphi 0, %s18
      %p15 = scmp.ge.s32.totalorder %s14, 4
      %s24 = sphi 0, %s26
      %s27 = sphi 0, %s24
      %s28 = sphi 0, %s27
      %s44 = sphi 0, %s28
      %s48 = sphi 0, %s48
      %s50 = sphi 0, %s48
      %s51 = sphi 0, %s50
      %s65 = sphi 0, %s51
      %s69 = sphi 0, %s69
      %s71 = sphi 0, %s69
      %s72 = sphi 0, %s71
      %s86 = sphi 0, %s72
      %s90 = sphi 0, %s90
      %s92 = sphi 0, %s90
      %s93 = sphi 0, %s92
      %s107 = sphi 0, %s93
      %s111 = sphi 0, %s111
      %s113 = sphi 0, %s111
      %s114 = sphi 0, %s113
      %s128 = sphi 0, %s114
      %s134 = sphi 0, %s136
      %s137 = sphi 0, %s134
      %s138 = sphi 0, %s137
      %s154 = sphi 0, %s138
    $region4: #{tpu_custom_call.1} parent=1 // loop_header_branch
      %17 = sbr.rel (%p15) target = $region8
    $region5: #{tpu_custom_call.1} parent=1 // loop_body
      %s19 = ssub.s32 %s14, 1
      %s20 = ssub.s32 %s14, 2
      %s21 = sadd.s32 %s14, 1
      %s22 = ssub.s32 %s14, %s21
      %p23 = scmp.eq.s32.totalorder %s22, 0
      %s25 = sadd.s32 %s24, 1
      %s26 = scalar_select %p23, %s24, %s25
      %p29 = pneg %p23
      %p30 = scmp.eq.s32.totalorder %s14, 1
      %p31 = por %p29, %p30
      %p32 = scmp.ne.s32.totalorder %s24, %s27
      %p33 = scmp.eq.s32.totalorder %s14, 0
      %p34 = por %p32, %p33
      %p35 = scmp.ne.s32.totalorder %s24, %s27
      %p36 = scmp.eq.s32.totalorder %s19, 1
      %p37 = por %p35, %p36
      %p38 = scmp.ne.s32.totalorder %s27, %s28
      %p39 = scmp.eq.s32.totalorder %s19, 0
      %p40 = por %p38, %p39
      %p41 = scmp.ne.s32.totalorder %s27, %s28
      %p42 = scmp.eq.s32.totalorder %s20, 1
      %p43 = por %p41, %p42
      %p45 = scmp.ne.s32.totalorder %s28, %s44
      %p46 = scmp.eq.s32.totalorder %s20, 0
      %p47 = por %p45, %p46
      %s49 = sadd.s32 %s48, 1
      %p52 = scmp.eq.s32.totalorder %s14, 1
      %p53 = scmp.ne.s32.totalorder %s48, %s50
      %p54 = scmp.eq.s32.totalorder %s14, 0
      %p55 = por %p53, %p54
      %p56 = scmp.ne.s32.totalorder %s48, %s50
      %p57 = scmp.eq.s32.totalorder %s19, 1
      %p58 = por %p56, %p57
      %p59 = scmp.ne.s32.totalorder %s50, %s51
      %p60 = scmp.eq.s32.totalorder %s19, 0
      %p61 = por %p59, %p60
      %p62 = scmp.ne.s32.totalorder %s50, %s51
      %p63 = scmp.eq.s32.totalorder %s20, 1
      %p64 = por %p62, %p63
      %p66 = scmp.ne.s32.totalorder %s51, %s65
      %p67 = scmp.eq.s32.totalorder %s20, 0
      %p68 = por %p66, %p67
      %s70 = sadd.s32 %s69, 1
      %p73 = scmp.eq.s32.totalorder %s14, 1
      %p74 = scmp.ne.s32.totalorder %s69, %s71
      %p75 = scmp.eq.s32.totalorder %s14, 0
      %p76 = por %p74, %p75
      %p77 = scmp.ne.s32.totalorder %s69, %s71
      %p78 = scmp.eq.s32.totalorder %s19, 1
      %p79 = por %p77, %p78
      %p80 = scmp.ne.s32.totalorder %s71, %s72
      %p81 = scmp.eq.s32.totalorder %s19, 0
      %p82 = por %p80, %p81
      %p83 = scmp.ne.s32.totalorder %s71, %s72
      %p84 = scmp.eq.s32.totalorder %s20, 1
      %p85 = por %p83, %p84
      %p87 = scmp.ne.s32.totalorder %s72, %s86
      %p88 = scmp.eq.s32.totalorder %s20, 0
      %p89 = por %p87, %p88
      %s91 = sadd.s32 %s90, 1
      %p94 = scmp.eq.s32.totalorder %s14, 1
      %p95 = scmp.ne.s32.totalorder %s90, %s92
      %p96 = scmp.eq.s32.totalorder %s14, 0
      %p97 = por %p95, %p96
      %p98 = scmp.ne.s32.totalorder %s90, %s92
      %p99 = scmp.eq.s32.totalorder %s19, 1
      %p100 = por %p98, %p99
      %p101 = scmp.ne.s32.totalorder %s92, %s93
      %p102 = scmp.eq.s32.totalorder %s19, 0
      %p103 = por %p101, %p102
      %p104 = scmp.ne.s32.totalorder %s92, %s93
      %p105 = scmp.eq.s32.totalorder %s20, 1
      %p106 = por %p104, %p105
      %p108 = scmp.ne.s32.totalorder %s93, %s107
      %p109 = scmp.eq.s32.totalorder %s20, 0
      %p110 = por %p108, %p109
      %s112 = sadd.s32 %s111, 1
      %p115 = scmp.eq.s32.totalorder %s14, 1
      %p116 = scmp.ne.s32.totalorder %s111, %s113
      %p117 = scmp.eq.s32.totalorder %s14, 0
      %p118 = por %p116, %p117
      %p119 = scmp.ne.s32.totalorder %s111, %s113
      %p120 = scmp.eq.s32.totalorder %s19, 1
      %p121 = por %p119, %p120
      %p122 = scmp.ne.s32.totalorder %s113, %s114
      %p123 = scmp.eq.s32.totalorder %s19, 0
      %p124 = por %p122, %p123
      %p125 = scmp.ne.s32.totalorder %s113, %s114
      %p126 = scmp.eq.s32.totalorder %s20, 1
      %p127 = por %p125, %p126
      %p129 = scmp.ne.s32.totalorder %s114, %s128
      %p130 = scmp.eq.s32.totalorder %s20, 0
      %p131 = por %p129, %p130
      %s132 = ssub.s32 %s14, %s21
      %p133 = scmp.eq.s32.totalorder %s132, 0
      %s135 = sadd.s32 %s134, 1
      %s136 = scalar_select %p133, %s134, %s135
      %p139 = pneg %p133
      %p140 = scmp.eq.s32.totalorder %s14, 1
      %p141 = por %p139, %p140
      %p142 = scmp.ne.s32.totalorder %s134, %s137
      %p143 = scmp.eq.s32.totalorder %s14, 0
      %p144 = por %p142, %p143
      %p145 = scmp.ne.s32.totalorder %s134, %s137
      %p146 = scmp.eq.s32.totalorder %s19, 1
      %p147 = por %p145, %p146
      %p148 = scmp.ne.s32.totalorder %s137, %s138
      %p149 = scmp.eq.s32.totalorder %s19, 0
      %p150 = por %p148, %p149
      %p151 = scmp.ne.s32.totalorder %s137, %s138
      %p152 = scmp.eq.s32.totalorder %s20, 1
      %p153 = por %p151, %p152
      %p155 = scmp.ne.s32.totalorder %s138, %s154
      %p156 = scmp.eq.s32.totalorder %s20, 0
      %p157 = por %p155, %p156
      %p158 = scmp.le.s32.totalorder 1, %s14
      %p159 = scmp.lt.s32.totalorder %s14, 3
      %p160 = pnand %p158, %p159
      %p161 = pneg %p160
      // Predicated region
      $region9: #{tpu_custom_call.1} parent=5 // pred_check
        _
      $region10: #{tpu_custom_call.1} parent=5 // pred_check_branch
        %163 = sbr.rel (%p160) target = $region12
      $region11: #{tpu_custom_call.1} parent=5 // pred_region
        %s164 = ssub.s32 %s14, 1
        // Predicated region
        $region13: #{tpu_custom_call.1} parent=11 // pred_check
          %p165 = pneg %p61
        $region14: #{tpu_custom_call.1} parent=11 // pred_check_branch
          %167 = sbr.rel (%p165) target = $region16
        $region15: #{tpu_custom_call.1} parent=11 // pred_region
          _
        $region16: #{tpu_custom_call.1} parent=11 // pred_fallthru
          _
        // Predicated region
        $region17: #{tpu_custom_call.1} parent=11 // pred_check
          %p168 = pneg %p82
        $region18: #{tpu_custom_call.1} parent=11 // pred_check_branch
          %170 = sbr.rel (%p168) target = $region20
        $region19: #{tpu_custom_call.1} parent=11 // pred_region
          _
        $region20: #{tpu_custom_call.1} parent=11 // pred_fallthru
          _
        // Predicated region
        $region21: #{tpu_custom_call.1} parent=11 // pred_check
          %p171 = pneg %p103
        $region22: #{tpu_custom_call.1} parent=11 // pred_check_branch
          %173 = sbr.rel (%p171) target = $region24
        $region23: #{tpu_custom_call.1} parent=11 // pred_region
          _
        $region24: #{tpu_custom_call.1} parent=11 // pred_fallthru
          _
        // Predicated region
        $region25: #{tpu_custom_call.1} parent=11 // pred_check
          %p174 = pneg %p124
        $region26: #{tpu_custom_call.1} parent=11 // pred_check_branch
          %176 = sbr.rel (%p174) target = $region28
        $region27: #{tpu_custom_call.1} parent=11 // pred_region
          _
        $region28: #{tpu_custom_call.1} parent=11 // pred_fallthru
          _
      $region12: #{tpu_custom_call.1} parent=5 // pred_fallthru
        _
      %p177 = scmp.lt.s32.totalorder %s14, 2
      // Predicated region
      $region29: #{tpu_custom_call.1} parent=5 // pred_check
        %p178 = pneg %p177
      $region30: #{tpu_custom_call.1} parent=5 // pred_check_branch
        %180 = sbr.rel (%p178) target = $region32
      $region31: #{tpu_custom_call.1} parent=5 // pred_region
        // Predicated region
        $region33: #{tpu_custom_call.1} parent=31 // pred_check
          %p181 = pneg %p34
        $region34: #{tpu_custom_call.1} parent=31 // pred_check_branch
          %183 = sbr.rel (%p181) target = $region36
        $region35: #{tpu_custom_call.1} parent=31 // pred_region
          %p184 = scmp.lt.s32.totalorder %s14, 1
          %s185 = scalar_select %p184, %s14, 1
          %s186 = smul.addr %s185, 8
          %s187 = scalar_lea.vmem %s0, %s186
        $region36: #{tpu_custom_call.1} parent=31 // pred_fallthru
          _
      $region32: #{tpu_custom_call.1} parent=5 // pred_fallthru
        _
      %p188 = scmp.le.s32.totalorder 1, %s14
      %p189 = scmp.lt.s32.totalorder %s14, 3
      %p190 = pnand %p188, %p189
      %p191 = pneg %p190
      // Predicated region
      $region37: #{tpu_custom_call.1} parent=5 // pred_check
        _
      $region38: #{tpu_custom_call.1} parent=5 // pred_check_branch
        %193 = sbr.rel (%p190) target = $region40
      $region39: #{tpu_custom_call.1} parent=5 // pred_region
        %s194 = ssub.s32 %s14, 1
        %p195 = scmp.lt.s32.totalorder %s19, 1
        %s196 = scalar_select %p195, %s19, 1
        %s197 = smul.addr %s196, 8
        %s198 = scalar_lea.vmem %s0, %s197
        %p199 = pneg %p40
        %p200 = pneg %p37
        %p201 = pneg %p61
        %p202 = pneg %p58
        %p203 = pneg %p82
        %p204 = pneg %p79
        %p205 = pneg %p103
        %p206 = pneg %p100
        %p207 = pneg %p124
        %p208 = pneg %p121
        %p209 = pneg %p150
        %p210 = pneg %p147
        %s211 = sand.u32 %s137, 1
        %s212 = scalar_lea.sflag [#allocation3], %s211
        %s213 = sand.u32 %s137, 1
        %s214 = smul.addr %s213, 8
        %s215 = scalar_lea.vmem [#allocation2], %s214
        %p216 = scmp.lt.s32.totalorder %s19, 1
        %s217 = scalar_select %p216, %s19, 1
        %s218 = smul.addr %s217, 8
        %s219 = scalar_lea.vmem %s0, %s218
        %v220 = vld [vmem:[%s219] sm:$0xff]
        %v221 = vld [vmem:[%s1] sm:$0xff]
        %v222 = vld [vmem:[%s1 + $0x8] sm:$0xff]
        %v223 = vld [vmem:[%s1 + $0x10] sm:$0xff]
        %v224 = vld [vmem:[%s1 + $0x18] sm:$0xff]
        %v225 = vld [vmem:[%s2] sm:$0x1]
        %v227 = vperm.slane %v225, 0
        %vm229 = vcmask 261120
        %v231 = vsel %vm229, %v220, 0
        %233 = vmatpush.msra.mxu0 0.0
        %234 = vmatpush.msra.mxu0 0.0
        %235 = vmatpush.msra.mxu0 0.0
        %236 = vmatpush.msra.mxu0 0.0
        %237 = vmatpush.msra.mxu0 0.0
        %238 = vmatpush.msra.mxu0 0.0
        %239 = vmatpush.msra.mxu0 0.0
        %240 = vmatpush.msra.mxu0 0.0
        %241 = vmatpush.msra.mxu0 0.0
        %242 = vmatpush.msra.mxu0 0.0
        %243 = vmatpush.msra.mxu0 0.0
        %244 = vmatpush.msra.mxu0 0.0
        %245 = vmatpush.msra.mxu0 %v224
        %246 = vmatpush.msra.mxu0 %v223
        %247 = vmatpush.msra.mxu0 %v222
        %248 = vmatpush.msra.mxu0 %v221
        %249 = vmatmul.f32.gmra.mxu0 %v231
        %v250 = vpop.f32.mrf.mxu0
        %v251 = vadd.f32 %v227, %v250
        %252 = vdwg.mxu0
        %v253 = vmax.f32 %v251, 0.0
        %v254 = vld [vmem:[%s3] sm:$0xff]
        %v255 = vld [vmem:[%s3 + $0x8] sm:$0xff]
        %v256 = vld [vmem:[%s3 + $0x10] sm:$0xff]
        %v257 = vld [vmem:[%s3 + $0x18] sm:$0xff]
        %v258 = vld [vmem:[%s3 + $0x20] sm:$0xff]
        %v259 = vld [vmem:[%s3 + $0x28] sm:$0xff]
        %v260 = vld [vmem:[%s3 + $0x30] sm:$0xff]
        %v261 = vld [vmem:[%s3 + $0x38] sm:$0xff]
        %v262 = vld [vmem:[%s4] sm:$0x1]
        %v264 = vperm.slane %v262, 0
        %vm266 = vcmask 523264
        %v268 = vsel %vm266, %v253, 0
        %270 = vmatpush.msra.mxu0 0.0
        %271 = vmatpush.msra.mxu0 0.0
        %272 = vmatpush.msra.mxu0 0.0
        %273 = vmatpush.msra.mxu0 0.0
        %274 = vmatpush.msra.mxu0 0.0
        %275 = vmatpush.msra.mxu0 0.0
        %276 = vmatpush.msra.mxu0 0.0
        %277 = vmatpush.msra.mxu0 0.0
        %278 = vmatpush.msra.mxu0 %v261
        %279 = vmatpush.msra.mxu0 %v260
        %280 = vmatpush.msra.mxu0 %v259
        %281 = vmatpush.msra.mxu0 %v258
        %282 = vmatpush.msra.mxu0 %v257
        %283 = vmatpush.msra.mxu0 %v256
        %284 = vmatpush.msra.mxu0 %v255
        %285 = vmatpush.msra.mxu0 %v254
        %286 = vmatmul.f32.gmra.mxu0 %v268
        %v287 = vpop.f32.mrf.mxu0
        %v288 = vadd.f32 %v264, %v287
        %289 = vdwg.mxu0
        %290 = vst.msk [vmem:[%s215] sm:$0xff] %vm229, %v288
        %s291 = sand.u32 %s137, 1
        %s292 = scalar_lea.sflag [#allocation3], %s291
        %s293 = sand.u32 %s137, 1
        %s294 = smul.addr %s293, 8
        %s295 = scalar_lea.vmem [#allocation2], %s294
        // Predicated region
        $region41: #{tpu_custom_call.1} parent=39 // pred_check
          %p296 = pneg %p147
        $region42: #{tpu_custom_call.1} parent=39 // pred_check_branch
          %298 = sbr.rel (%p296) target = $region44
        $region43: #{tpu_custom_call.1} parent=39 // pred_region
          %300 = vsyncadd %s292, 0
          %s301 = smul.addr %s19, 8
          %s302 = scalar_lea.hbm %s5, %s301
          %s304 = sshll.u32 %s295, 4
          %s305 = int_to_ptr.vmem [resolvable:$true] %s304
          %s306 = sshll.u32 %s302, 4
          %s307 = int_to_ptr.hbm [resolvable:$true] %s306
          %309 = dma.vmem_to_hbm [thread:$0]  %s305, 128, %s307, %s292
        $region44: #{tpu_custom_call.1} parent=39 // pred_fallthru
          _
      $region40: #{tpu_custom_call.1} parent=5 // pred_fallthru
        _
      %p310 = scmp.le.s32.totalorder 2, %s14
      // Predicated region
      $region45: #{tpu_custom_call.1} parent=5 // pred_check
        %p311 = pneg %p310
      $region46: #{tpu_custom_call.1} parent=5 // pred_check_branch
        %313 = sbr.rel (%p311) target = $region48
      $region47: #{tpu_custom_call.1} parent=5 // pred_region
        %s314 = ssub.s32 %s14, 2
        // Predicated region
        $region49: #{tpu_custom_call.1} parent=47 // pred_check
          %p315 = pneg %p153
        $region50: #{tpu_custom_call.1} parent=47 // pred_check_branch
          %317 = sbr.rel (%p315) target = $region52
        $region51: #{tpu_custom_call.1} parent=47 // pred_region
          %s318 = sand.u32 %s138, 1
          %s319 = scalar_lea.sflag [#allocation3], %s318
          %s320 = sand.u32 %s138, 1
          %s321 = smul.addr %s320, 8
          %s322 = scalar_lea.vmem [#allocation2], %s321
          %324 = dma.done %s319, 128
        $region52: #{tpu_custom_call.1} parent=47 // pred_fallthru
          _
      $region48: #{tpu_custom_call.1} parent=5 // pred_fallthru
        _
    $region6: #{tpu_custom_call.1} parent=1 // loop_footer
      %s18 = sadd.s32 1, %s14
    $region7: #{tpu_custom_call.1} parent=1 // loop_footer_branch
      %13 = sbr.rel target = $region3
    $region8: #{tpu_custom_call.1} parent=1 // loop_exit
      _
    %325 = vsyncpa [#allocation3], 1
    %s326 = scalar_lea.sflag [#allocation3], 1
    %327 = vsyncpa %s326, 1

</llo_original>
